<compile_context>
chip_gen: v7x
topology: tpu7x:2x2x1
jax: 0.10.0
libtpu: 0.0.40
codegen_flags: <defaults>
</compile_context>

<pallas_src>
import jax
import jax.numpy as jnp
from jax import lax
from jax.experimental import pallas as pl
from jax.experimental.pallas import tpu as pltpu


def _lovasz_flat_kernel(gts_ref, err_ref, fg_ref, out_ref,
                        tri_ref, cum_off_ref, prev_jac_ref, loss_ref):
    """Per-tile body.

    gts_ref : [C, 1]  f32, per-class total foreground count (resident).
    err_ref : [C, Tp] f32, sorted-descending errors, current pixel tile.
    fg_ref  : [C, Tp] f32, fg permuted by the same sort, current pixel tile.
    out_ref : [1, 1]  f32 scalar loss (written at the last step).
    tri_ref : [Tp,Tp] bf16 scratch, inclusive upper-triangular ones (built once).
    cum_off_ref / prev_jac_ref / loss_ref : [C, 1] f32 carried state.
    """
    step = pl.program_id(0)
    n_steps = pl.num_programs(0)

    @pl.when(step == 0)
    def _init():
        tp = tri_ref.shape[0]
        row = lax.broadcasted_iota(jnp.int32, (tp, tp), 0)
        col = lax.broadcasted_iota(jnp.int32, (tp, tp), 1)
        tri_ref[...] = jnp.where(row <= col, 1.0, 0.0).astype(jnp.bfloat16)
        cum_off_ref[...] = jnp.zeros_like(cum_off_ref)
        prev_jac_ref[...] = jnp.zeros_like(prev_jac_ref)
        loss_ref[...] = jnp.zeros_like(loss_ref)

    err = err_ref[...]                      # [C, Tp]
    fg = fg_ref[...]                        # [C, Tp]
    gts = gts_ref[...]                      # [C, 1]
    c_dim, tp = fg.shape

    # Tile-local inclusive prefix sum via MXU (bf16 0/1 operands, exact in f32).
    cum_local = jnp.dot(fg.astype(jnp.bfloat16), tri_ref[...],
                        preferred_element_type=jnp.float32)          # [C, Tp]
    cum = cum_local + cum_off_ref[...]                               # global cumsum

    pos = lax.broadcasted_iota(jnp.int32, (c_dim, tp), 1)            # 0..Tp-1
    base = (step * tp).astype(jnp.float32)
    idx = base + pos.astype(jnp.float32) + 1.0                       # global 1..P

    intersection = gts - cum                                         # [C, Tp]
    union = gts + (idx - cum)                                        # >= 1 always
    jaccard = 1.0 - intersection / union                             # [C, Tp]

    # lovasz_grad: jaccard[:, i] - jaccard[:, i-1]; position -1 carried across
    # tiles (initialized to 0, which matches jaccard's value "before" index 0).
    prev = pltpu.roll(jaccard, shift=1, axis=1)
    prev = jnp.where(pos == 0, prev_jac_ref[...], prev)
    grad = jaccard - prev                                            # [C, Tp]

    loss_ref[...] += jnp.sum(err * grad, axis=-1, keepdims=True)     # [C, 1]
    cum_off_ref[...] = cum[:, tp - 1:tp]
    prev_jac_ref[...] = jaccard[:, tp - 1:tp]

    @pl.when(step == n_steps - 1)
    def _finalize():
        present = (gts > 0.0).astype(jnp.float32)                    # [C, 1]
        num = jnp.sum(loss_ref[...] * present, axis=0, keepdims=True)  # [1, 1]
        den = jnp.sum(present, axis=0, keepdims=True)                  # [1, 1]
        # TODO(synk): the PyTorch reference raises (mean of empty list) when no
        # class is present; here we return 0.0 instead of NaN / raising.
        out_ref[...] = jnp.where(den > 0.0, num / den, 0.0)


def lovasz_softmax_flat_pallas(preds, labels, *, block_p=512):
    """preds: [P, C] float32 class probabilities, labels: [P] int labels."""
    preds = preds.astype(jnp.float32)
    p_dim, c_dim = preds.shape

    # ---- JAX glue: per-class fg / errors and the descending sort ----
    # TODO(synk): the data-dependent descending sort has no clean in-kernel
    # equivalent; jnp.argsort tie order may differ from torch.sort(descending).
    classes = jnp.arange(c_dim, dtype=labels.dtype)
    fg = (labels[None, :] == classes[:, None]).astype(jnp.float32)    # [C, P]
    errors = jnp.abs(fg - preds.T)                                    # [C, P]
    order = jnp.argsort(-errors, axis=1)                              # descending
    errors_sorted = jnp.take_along_axis(errors, order, axis=1)        # [C, P]
    fg_sorted = jnp.take_along_axis(fg, order, axis=1)                # [C, P]
    gts = jnp.sum(fg, axis=1, keepdims=True)                          # [C, 1]

    # ---- pad the pixel axis to a multiple of the tile size ----
    block_p = int(max(128, min(block_p, 1024)))
    num_blocks = -(-p_dim // block_p)
    p_pad = num_blocks * block_p
    if p_pad != p_dim:
        pad = ((0, 0), (0, p_pad - p_dim))
        errors_sorted = jnp.pad(errors_sorted, pad)   # err = 0, fg = 0 in pad
        fg_sorted = jnp.pad(fg_sorted, pad)

    out = pl.pallas_call(
        _lovasz_flat_kernel,
        out_shape=jax.ShapeDtypeStruct((1, 1), jnp.float32),
        grid_spec=pltpu.PrefetchScalarGridSpec(
            num_scalar_prefetch=0,
            grid=(num_blocks,),
            in_specs=[
                pl.BlockSpec((c_dim, 1), lambda s: (0, 0)),        # gts, resident
                pl.BlockSpec((c_dim, block_p), lambda s: (0, s)),  # errors tile
                pl.BlockSpec((c_dim, block_p), lambda s: (0, s)),  # fg tile
            ],
            out_specs=pl.BlockSpec((1, 1), lambda s: (0, 0)),
            scratch_shapes=[
                pltpu.VMEM((block_p, block_p), jnp.bfloat16),  # tri (built once)
                pltpu.VMEM((c_dim, 1), jnp.float32),           # running cumsum
                pltpu.VMEM((c_dim, 1), jnp.float32),           # prev-tile jaccard
                pltpu.VMEM((c_dim, 1), jnp.float32),           # loss accumulator
            ],
        ),
        compiler_params=pltpu.CompilerParams(
            dimension_semantics=("arbitrary",),
        ),
    )(gts, errors_sorted, fg_sorted)
    return out[0, 0]


def lovasz_softmax_flat_ref(preds, labels):
    """Pure-JAX reference (mirrors the PyTorch implementation)."""
    p_dim, c_dim = preds.shape
    losses, present = [], []
    for c in range(c_dim):
        fg = (labels == c).astype(jnp.float32)
        errors = jnp.abs(fg - preds[:, c])
        order = jnp.argsort(-errors)
        es = errors[order]
        fs = fg[order]
        gts = jnp.sum(fs)
        inter = gts - jnp.cumsum(fs)
        union = gts + jnp.cumsum(1.0 - fs)
        jac = 1.0 - inter / union
        grad = jnp.concatenate([jac[:1], jac[1:] - jac[:-1]])
        losses.append(jnp.dot(es, grad))
        present.append((gts > 0).astype(jnp.float32))
    losses = jnp.stack(losses)
    present = jnp.stack(present)
    return jnp.sum(losses * present) / jnp.sum(present)


class LovaszSoftmaxFlat:
    """Parameter-free module equivalent of Lovasz_Softmax_Flat."""

    def __init__(self, block_p=512):
        self.block_p = block_p

    def __call__(self, preds, labels):
        return lovasz_softmax_flat_pallas(preds, labels, block_p=self.block_p)


if __name__ == "__main__":
    key = jax.random.PRNGKey(0)
    B, C, H, W = 2, 4, 16, 16
    P = B * H * W                                    # 512 flattened pixels

    k1, k2 = jax.random.split(key)
    logits = jax.random.normal(k1, (P, C), dtype=jnp.float32)
    preds = jax.nn.softmax(logits, axis=-1)          # probabilities, [P, C]
    labels = jax.random.randint(k2, (P,), 0, C, dtype=jnp.int32)

    # block_p=128 -> 4 grid steps at P=512: exercises the tiled carry path.
    module = LovaszSoftmaxFlat(block_p=128)
    loss = jax.block_until_ready(module(preds, labels))

    ref = lovasz_softmax_flat_ref(preds, labels)
    assert jnp.isfinite(loss), loss
    assert jnp.allclose(loss, ref, atol=1e-5, rtol=1e-5), (loss, ref)

    print("KERNEL_OK")
</pallas_src>

<mosaic_0001>
module attributes {stable_mosaic.version = 11 : i64} {
  func.func @_lovasz_flat_kernel(%arg0: i32, %arg1: memref<4x1xf32, #tpu.memory_space<vmem>>, %arg2: memref<4x128xf32, #tpu.memory_space<vmem>>, %arg3: memref<4x128xf32, #tpu.memory_space<vmem>>, %arg4: memref<1x1xf32, #tpu.memory_space<vmem>>, %arg5: memref<128x128xbf16, #tpu.memory_space<vmem>>, %arg6: memref<4x1xf32, #tpu.memory_space<vmem>>, %arg7: memref<4x1xf32, #tpu.memory_space<vmem>>, %arg8: memref<4x1xf32, #tpu.memory_space<vmem>>) attributes {dimension_semantics = [#tpu.dimension_semantics<arbitrary>], iteration_bounds = array<i64: 4>, scalar_prefetch = 0 : i64, scratch_operands = 4 : i64, tpu.core_type = #tpu.core_type<tc>, window_params = [{pipeline_mode = #tpu.pipeline_mode<synchronous>, transform_indices = @transform_0, window_bounds = array<i64: 4, 1>}, {transform_indices = @transform_1, window_bounds = array<i64: 4, 128>}, {transform_indices = @transform_2, window_bounds = array<i64: 4, 128>}, {pipeline_mode = #tpu.pipeline_mode<synchronous>, transform_indices = @transform_3, window_bounds = array<i64: 1, 1>}]} {
    %c0_i32 = arith.constant 0 : i32
    %0 = arith.cmpi eq, %arg0, %c0_i32 : i32
    %1 = arith.extui %0 : i1 to i32
    %c0_i32_0 = arith.constant 0 : i32
    %2 = arith.cmpi ne, %1, %c0_i32_0 : i32
    scf.if %2 {
      %49 = tpu.iota {dimensions = array<i32: 0>} : vector<128x128xi32>
      %50 = tpu.iota {dimensions = array<i32: 1>} : vector<128x128xi32>
      %51 = arith.cmpi sle, %49, %50 : vector<128x128xi32>
      %cst_25 = arith.constant 1.000000e+00 : f32
      %cst_26 = arith.constant 0.000000e+00 : f32
      %52 = vector.broadcast %cst_25 : f32 to vector<128x128xf32>
      %53 = vector.broadcast %cst_26 : f32 to vector<128x128xf32>
      %54 = arith.select %51, %52, %53 : vector<128x128xi1>, vector<128x128xf32>
      %55 = arith.truncf %54 : vector<128x128xf32> to vector<128x128xbf16>
      %c0_27 = arith.constant 0 : index
      %c0_28 = arith.constant 0 : index
      %56 = vector.load %arg5[%c0_27, %c0_28] : memref<128x128xbf16, #tpu.memory_space<vmem>>, vector<128x128xbf16>
      tpu.vector_store %arg5[%c0_27, %c0_28], %55 {strides = array<i32>} : memref<128x128xbf16, #tpu.memory_space<vmem>>, vector<128x128xbf16>,
      %cst_29 = arith.constant 0.000000e+00 : f32
      %57 = vector.broadcast %cst_29 : f32 to vector<4x1xf32>
      %c0_30 = arith.constant 0 : index
      %c0_31 = arith.constant 0 : index
      %58 = vector.load %arg6[%c0_30, %c0_31] : memref<4x1xf32, #tpu.memory_space<vmem>>, vector<4x1xf32>
      tpu.vector_store %arg6[%c0_30, %c0_31], %57 {strides = array<i32>} : memref<4x1xf32, #tpu.memory_space<vmem>>, vector<4x1xf32>,
      %cst_32 = arith.constant 0.000000e+00 : f32
      %59 = vector.broadcast %cst_32 : f32 to vector<4x1xf32>
      %c0_33 = arith.constant 0 : index
      %c0_34 = arith.constant 0 : index
      %60 = vector.load %arg7[%c0_33, %c0_34] : memref<4x1xf32, #tpu.memory_space<vmem>>, vector<4x1xf32>
      tpu.vector_store %arg7[%c0_33, %c0_34], %59 {strides = array<i32>} : memref<4x1xf32, #tpu.memory_space<vmem>>, vector<4x1xf32>,
      %cst_35 = arith.constant 0.000000e+00 : f32
      %61 = vector.broadcast %cst_35 : f32 to vector<4x1xf32>
      %c0_36 = arith.constant 0 : index
      %c0_37 = arith.constant 0 : index
      %62 = vector.load %arg8[%c0_36, %c0_37] : memref<4x1xf32, #tpu.memory_space<vmem>>, vector<4x1xf32>
      tpu.vector_store %arg8[%c0_36, %c0_37], %61 {strides = array<i32>} : memref<4x1xf32, #tpu.memory_space<vmem>>, vector<4x1xf32>,
    } else {
    }
    %c0 = arith.constant 0 : index
    %c0_1 = arith.constant 0 : index
    %3 = vector.load %arg2[%c0, %c0_1] : memref<4x128xf32, #tpu.memory_space<vmem>>, vector<4x128xf32>
    %c0_2 = arith.constant 0 : index
    %c0_3 = arith.constant 0 : index
    %4 = vector.load %arg3[%c0_2, %c0_3] : memref<4x128xf32, #tpu.memory_space<vmem>>, vector<4x128xf32>
    %c0_4 = arith.constant 0 : index
    %c0_5 = arith.constant 0 : index
    %5 = vector.load %arg1[%c0_4, %c0_5] : memref<4x1xf32, #tpu.memory_space<vmem>>, vector<4x1xf32>
    %6 = arith.truncf %4 : vector<4x128xf32> to vector<4x128xbf16>
    %c0_6 = arith.constant 0 : index
    %c0_7 = arith.constant 0 : index
    %7 = vector.load %arg5[%c0_6, %c0_7] : memref<128x128xbf16, #tpu.memory_space<vmem>>, vector<128x128xbf16>
    %cst = arith.constant dense<0.000000e+00> : vector<4x128xf32>
    %8 = tpu.matmul %6, %7, %cst {dimension_numbers = #tpu.dot_dimension_numbers<[1], [0], [0], [1], [0, 0, 1, 1], [], []>} : vector<4x128xbf16>, vector<128x128xbf16>, vector<4x128xf32> -> vector<4x128xf32>
    %c0_8 = arith.constant 0 : index
    %c0_9 = arith.constant 0 : index
    %9 = vector.load %arg6[%c0_8, %c0_9] : memref<4x1xf32, #tpu.memory_space<vmem>>, vector<4x1xf32>
    %10 = vector.broadcast %9 : vector<4x1xf32> to vector<4x128xf32>
    %11 = arith.addf %8, %10 : vector<4x128xf32>
    %12 = tpu.iota {dimensions = array<i32: 1>} : vector<4x128xi32>
    %c128_i32 = arith.constant 128 : i32
    %13 = arith.muli %arg0, %c128_i32 : i32
    %14 = arith.sitofp %13 : i32 to f32
    %15 = arith.sitofp %12 : vector<4x128xi32> to vector<4x128xf32>
    %16 = vector.broadcast %14 : f32 to vector<4x128xf32>
    %17 = arith.addf %16, %15 : vector<4x128xf32>
    %cst_10 = arith.constant 1.000000e+00 : f32
    %18 = vector.broadcast %cst_10 : f32 to vector<4x128xf32>
    %19 = arith.addf %17, %18 : vector<4x128xf32>
    %20 = vector.broadcast %5 : vector<4x1xf32> to vector<4x128xf32>
    %21 = arith.subf %20, %11 : vector<4x128xf32>
    %22 = arith.subf %19, %11 : vector<4x128xf32>
    %23 = vector.broadcast %5 : vector<4x1xf32> to vector<4x128xf32>
    %24 = arith.addf %23, %22 : vector<4x128xf32>
    %25 = arith.divf %21, %24 : vector<4x128xf32>
    %cst_11 = arith.constant 1.000000e+00 : f32
    %26 = vector.broadcast %cst_11 : f32 to vector<4x128xf32>
    %27 = arith.subf %26, %25 : vector<4x128xf32>
    %c1_i32 = arith.constant 1 : i32
    %28 = tpu.dynamic_rotate %27 by %c1_i32 dim 1 : vector<4x128xf32>, i32 -> vector<4x128xf32>
    %c0_i32_12 = arith.constant 0 : i32
    %29 = vector.broadcast %c0_i32_12 : i32 to vector<4x128xi32>
    %30 = arith.cmpi eq, %12, %29 : vector<4x128xi32>
    %c0_13 = arith.constant 0 : index
    %c0_14 = arith.constant 0 : index
    %31 = vector.load %arg7[%c0_13, %c0_14] : memref<4x1xf32, #tpu.memory_space<vmem>>, vector<4x1xf32>
    %32 = vector.shape_cast %31 : vector<4x1xf32> to vector<4x1xf32>
    %33 = vector.broadcast %32 : vector<4x1xf32> to vector<4x128xf32>
    %34 = arith.select %30, %33, %28 : vector<4x128xi1>, vector<4x128xf32>
    %35 = arith.subf %27, %34 : vector<4x128xf32>
    %c0_15 = arith.constant 0 : index
    %c0_16 = arith.constant 0 : index
    %36 = vector.load %arg8[%c0_15, %c0_16] : memref<4x1xf32, #tpu.memory_space<vmem>>, vector<4x1xf32>
    %37 = arith.mulf %3, %35 : vector<4x128xf32>
    %cst_17 = arith.constant dense<0.000000e+00> : vector<4xf32>
    %38 = vector.multi_reduction <add>, %37, %cst_17 [1] : vector<4x128xf32> to vector<4xf32>
    %39 = vector.shape_cast %38 : vector<4xf32> to vector<4x1xf32>
    %40 = arith.addf %36, %39 : vector<4x1xf32>
    %c0_18 = arith.constant 0 : index
    %c0_19 = arith.constant 0 : index
    %41 = vector.load %arg8[%c0_18, %c0_19] : memref<4x1xf32, #tpu.memory_space<vmem>>, vector<4x1xf32>
    tpu.vector_store %arg8[%c0_18, %c0_19], %40 {strides = array<i32>} : memref<4x1xf32, #tpu.memory_space<vmem>>, vector<4x1xf32>,
    %42 = vector.extract_strided_slice %11 {offsets = [0, 127], sizes = [4, 1], strides = [1, 1]} : vector<4x128xf32> to vector<4x1xf32>
    %c0_20 = arith.constant 0 : index
    %c0_21 = arith.constant 0 : index
    %43 = vector.load %arg6[%c0_20, %c0_21] : memref<4x1xf32, #tpu.memory_space<vmem>>, vector<4x1xf32>
    tpu.vector_store %arg6[%c0_20, %c0_21], %42 {strides = array<i32>} : memref<4x1xf32, #tpu.memory_space<vmem>>, vector<4x1xf32>,
    %44 = vector.extract_strided_slice %27 {offsets = [0, 127], sizes = [4, 1], strides = [1, 1]} : vector<4x128xf32> to vector<4x1xf32>
    %c0_22 = arith.constant 0 : index
    %c0_23 = arith.constant 0 : index
    %45 = vector.load %arg7[%c0_22, %c0_23] : memref<4x1xf32, #tpu.memory_space<vmem>>, vector<4x1xf32>
    tpu.vector_store %arg7[%c0_22, %c0_23], %44 {strides = array<i32>} : memref<4x1xf32, #tpu.memory_space<vmem>>, vector<4x1xf32>,
    %c3_i32 = arith.constant 3 : i32
    %46 = arith.cmpi eq, %arg0, %c3_i32 : i32
    %47 = arith.extui %46 : i1 to i32
    %c0_i32_24 = arith.constant 0 : i32
    %48 = arith.cmpi ne, %47, %c0_i32_24 : i32
    scf.if %48 {
      %cst_25 = arith.constant 0.000000e+00 : f32
      %49 = vector.broadcast %cst_25 : f32 to vector<4x1xf32>
      %50 = arith.cmpf ogt, %5, %49 : vector<4x1xf32>
      %51 = arith.extui %50 : vector<4x1xi1> to vector<4x1xi32>
      %52 = arith.sitofp %51 : vector<4x1xi32> to vector<4x1xf32>
      %c0_26 = arith.constant 0 : index
      %c0_27 = arith.constant 0 : index
      %53 = vector.load %arg8[%c0_26, %c0_27] : memref<4x1xf32, #tpu.memory_space<vmem>>, vector<4x1xf32>
      %54 = arith.mulf %53, %52 : vector<4x1xf32>
      %cst_28 = arith.constant dense<0.000000e+00> : vector<1xf32>
      %55 = vector.multi_reduction <add>, %54, %cst_28 [0] : vector<4x1xf32> to vector<1xf32>
      %56 = vector.shape_cast %55 : vector<1xf32> to vector<1x1xf32>
      %cst_29 = arith.constant dense<0.000000e+00> : vector<1xf32>
      %57 = vector.multi_reduction <add>, %52, %cst_29 [0] : vector<4x1xf32> to vector<1xf32>
      %58 = vector.shape_cast %57 : vector<1xf32> to vector<1x1xf32>
      %cst_30 = arith.constant 0.000000e+00 : f32
      %59 = vector.broadcast %cst_30 : f32 to vector<1x1xf32>
      %60 = arith.cmpf ogt, %58, %59 : vector<1x1xf32>
      %61 = arith.divf %56, %58 : vector<1x1xf32>
      %cst_31 = arith.constant 0.000000e+00 : f32
      %62 = vector.broadcast %cst_31 : f32 to vector<1x1xf32>
      %63 = arith.select %60, %61, %62 : vector<1x1xi1>, vector<1x1xf32>
      %c0_32 = arith.constant 0 : index
      %c0_33 = arith.constant 0 : index
      %64 = vector.load %arg4[%c0_32, %c0_33] : memref<1x1xf32, #tpu.memory_space<vmem>>, vector<1x1xf32>
      tpu.vector_store %arg4[%c0_32, %c0_33], %63 {strides = array<i32>} : memref<1x1xf32, #tpu.memory_space<vmem>>, vector<1x1xf32>,
    } else {
    }
    return
  }
  func.func @transform_0(%arg0: i32) -> (i32, i32) {
    %c0_i32 = arith.constant 0 : i32
    %c0_i32_0 = arith.constant 0 : i32
    %c0_i32_1 = arith.constant 0 : i32
    return %c0_i32, %c0_i32_0 : i32, i32
  }
  func.func @transform_1(%arg0: i32) -> (i32, i32) {
    %c0_i32 = arith.constant 0 : i32
    %c0_i32_0 = arith.constant 0 : i32
    return %c0_i32, %arg0 : i32, i32
  }
  func.func @transform_2(%arg0: i32) -> (i32, i32) {
    %c0_i32 = arith.constant 0 : i32
    %c0_i32_0 = arith.constant 0 : i32
    return %c0_i32, %arg0 : i32, i32
  }
  func.func @transform_3(%arg0: i32) -> (i32, i32) {
    %c0_i32 = arith.constant 0 : i32
    %c0_i32_0 = arith.constant 0 : i32
    %c0_i32_1 = arith.constant 0 : i32
    return %c0_i32, %c0_i32_0 : i32, i32
  }
}

</mosaic_0001>

<llo_original>
// kernel: tpu_custom_call.1
$region0: #{tpu_custom_call.1}
  #allocation0 [shape = 'u32[]', space=smem, size = 0x4, offset = 0x4, fixed_abs, tag = 'smem constant byte address 0x4 - core index']
  #allocation1 [shape = 'u32[144,128]{1,0:T(1,128)}', space=vmem, size = 0x12000, scoped, tag = 'internal scratch']
  #allocation2 [shape = 'bf16[128,128]{1,0:T(16,128)(2,1)}', space=vmem, size = 0x8000, scoped, tag = 'scratch operand']
  #allocation3 [shape = 'f32[4,1]{1,0:T(4,128)}', space=vmem, size = 0x800, scoped, tag = 'scratch operand']
  #allocation4 [shape = 'f32[4,1]{1,0:T(4,128)}', space=vmem, size = 0x800, scoped, tag = 'scratch operand']
  #allocation5 [shape = 'f32[4,1]{1,0:T(4,128)}', space=vmem, size = 0x800, scoped, tag = 'scratch operand']
  %s0 = inlined_call_operand.vmem [shape: f32[4,1], index: 0, kind: input, shape index: {}]
  %s1 = inlined_call_operand.hbm [shape: f32[4,512], index: 1, kind: input, shape index: {}]
  %s2 = inlined_call_operand.hbm [shape: f32[4,512], index: 2, kind: input, shape index: {}]
  %s3 = inlined_call_operand.hbm [shape: f32[1,1], index: 3, kind: output, shape index: {}]
  %s4 = sld [smem:[#allocation0]]
  $region61: #{tpu_custom_call.1} parent=0
    _
  %s6 = ssub.s32 1, %s4
  %s7 = scalar_select 0, %s6, %s4
  $region1: #{tpu_custom_call.1} parent=0
    #allocation6 [shape = 'u8[4096]{0}', space=vmem, size = 0x1000, scoped, tag = 'input window, operand 1']
    #allocation7 [shape = 's32[2]{0}', space=sflag, size = 0x8, scoped, tag = 'scoped memory for tpu_custom_call.1']
    #allocation8 [shape = 's32[2]{0}', space=sflag, size = 0x8, scoped, tag = 'scoped memory for tpu_custom_call.1']
    #allocation9 [shape = 'u8[4096]{0}', space=vmem, size = 0x1000, scoped, tag = 'input window, operand 2']
    #allocation10 [shape = 's32[2]{0}', space=sflag, size = 0x8, scoped, tag = 'scoped memory for tpu_custom_call.1']
    #allocation11 [shape = 'u8[512]{0}', space=vmem, size = 0x400, scoped, tag = 'output window, operand 0, single buffered']
    %8 = vsyncpa [#allocation7], 0
    %s9 = scalar_lea.sflag [#allocation7], 1
    %10 = vsyncpa %s9, 0
    %11 = vsyncpa [#allocation10], 0
    %s12 = scalar_lea.sflag [#allocation10], 1
    %13 = vsyncpa %s12, 0
    %14 = vsyncpa [#allocation8], 0
    loop: start=0, step=1, limit=6
    $region2: #{tpu_custom_call.1} parent=1 // loop_pre_header
      _
    $region3: #{tpu_custom_call.1} parent=1 // loop_header
      %s16 = sphi 0, %s20
      %p17 = scmp.ge.s32.totalorder %s16, 6
      %s24 = sphi 0, %s24
      %s26 = sphi 0, %s24
      %s27 = sphi 0, %s26
      %s41 = sphi 0, %s27
      %s47 = sphi 0, %s49
      %s50 = sphi 0, %s47
      %s51 = sphi 0, %s50
      %s67 = sphi 0, %s51
      %s73 = sphi 0, %s75
      %s76 = sphi 0, %s73
      %s77 = sphi 0, %s76
      %s93 = sphi 0, %s77
      %s97 = sphi 0, %s97
      %s99 = sphi 0, %s97
      %s100 = sphi 0, %s99
      %s114 = sphi 0, %s100
    $region4: #{tpu_custom_call.1} parent=1 // loop_header_branch
      %19 = sbr.rel (%p17) target = $region8
    $region5: #{tpu_custom_call.1} parent=1 // loop_body
      %s21 = ssub.s32 %s16, 1
      %s22 = ssub.s32 %s16, 2
      %s23 = sadd.s32 %s16, 1
      %s25 = sadd.s32 %s24, 1
      %p28 = scmp.eq.s32.totalorder %s16, 3
      %p29 = scmp.ne.s32.totalorder %s24, %s26
      %p30 = scmp.eq.s32.totalorder %s16, 0
      %p31 = por %p29, %p30
      %p32 = scmp.ne.s32.totalorder %s24, %s26
      %p33 = scmp.eq.s32.totalorder %s21, 3
      %p34 = por %p32, %p33
      %p35 = scmp.ne.s32.totalorder %s26, %s27
      %p36 = scmp.eq.s32.totalorder %s21, 0
      %p37 = por %p35, %p36
      %p38 = scmp.ne.s32.totalorder %s26, %s27
      %p39 = scmp.eq.s32.totalorder %s22, 3
      %p40 = por %p38, %p39
      %p42 = scmp.ne.s32.totalorder %s27, %s41
      %p43 = scmp.eq.s32.totalorder %s22, 0
      %p44 = por %p42, %p43
      %s45 = ssub.s32 %s16, %s23
      %p46 = scmp.eq.s32.totalorder %s45, 0
      %s48 = sadd.s32 %s47, 1
      %s49 = scalar_select %p46, %s47, %s48
      %p52 = pneg %p46
      %p53 = scmp.eq.s32.totalorder %s16, 3
      %p54 = por %p52, %p53
      %p55 = scmp.ne.s32.totalorder %s47, %s50
      %p56 = scmp.eq.s32.totalorder %s16, 0
      %p57 = por %p55, %p56
      %p58 = scmp.ne.s32.totalorder %s47, %s50
      %p59 = scmp.eq.s32.totalorder %s21, 3
      %p60 = por %p58, %p59
      %p61 = scmp.ne.s32.totalorder %s50, %s51
      %p62 = scmp.eq.s32.totalorder %s21, 0
      %p63 = por %p61, %p62
      %p64 = scmp.ne.s32.totalorder %s50, %s51
      %p65 = scmp.eq.s32.totalorder %s22, 3
      %p66 = por %p64, %p65
      %p68 = scmp.ne.s32.totalorder %s51, %s67
      %p69 = scmp.eq.s32.totalorder %s22, 0
      %p70 = por %p68, %p69
      %s71 = ssub.s32 %s16, %s23
      %p72 = scmp.eq.s32.totalorder %s71, 0
      %s74 = sadd.s32 %s73, 1
      %s75 = scalar_select %p72, %s73, %s74
      %p78 = pneg %p72
      %p79 = scmp.eq.s32.totalorder %s16, 3
      %p80 = por %p78, %p79
      %p81 = scmp.ne.s32.totalorder %s73, %s76
      %p82 = scmp.eq.s32.totalorder %s16, 0
      %p83 = por %p81, %p82
      %p84 = scmp.ne.s32.totalorder %s73, %s76
      %p85 = scmp.eq.s32.totalorder %s21, 3
      %p86 = por %p84, %p85
      %p87 = scmp.ne.s32.totalorder %s76, %s77
      %p88 = scmp.eq.s32.totalorder %s21, 0
      %p89 = por %p87, %p88
      %p90 = scmp.ne.s32.totalorder %s76, %s77
      %p91 = scmp.eq.s32.totalorder %s22, 3
      %p92 = por %p90, %p91
      %p94 = scmp.ne.s32.totalorder %s77, %s93
      %p95 = scmp.eq.s32.totalorder %s22, 0
      %p96 = por %p94, %p95
      %s98 = sadd.s32 %s97, 1
      %p101 = scmp.eq.s32.totalorder %s16, 3
      %p102 = scmp.ne.s32.totalorder %s97, %s99
      %p103 = scmp.eq.s32.totalorder %s16, 0
      %p104 = por %p102, %p103
      %p105 = scmp.ne.s32.totalorder %s97, %s99
      %p106 = scmp.eq.s32.totalorder %s21, 3
      %p107 = por %p105, %p106
      %p108 = scmp.ne.s32.totalorder %s99, %s100
      %p109 = scmp.eq.s32.totalorder %s21, 0
      %p110 = por %p108, %p109
      %p111 = scmp.ne.s32.totalorder %s99, %s100
      %p112 = scmp.eq.s32.totalorder %s22, 3
      %p113 = por %p111, %p112
      %p115 = scmp.ne.s32.totalorder %s100, %s114
      %p116 = scmp.eq.s32.totalorder %s22, 0
      %p117 = por %p115, %p116
      %p118 = scmp.le.s32.totalorder 1, %s16
      %p119 = scmp.lt.s32.totalorder %s16, 5
      %p120 = pnand %p118, %p119
      %p121 = pneg %p120
      // Predicated region
      $region9: #{tpu_custom_call.1} parent=5 // pred_check
        _
      $region10: #{tpu_custom_call.1} parent=5 // pred_check_branch
        %123 = sbr.rel (%p120) target = $region12
      $region11: #{tpu_custom_call.1} parent=5 // pred_region
        %s124 = ssub.s32 %s16, 1
        // Predicated region
        $region13: #{tpu_custom_call.1} parent=11 // pred_check
          %p125 = pneg %p37
        $region14: #{tpu_custom_call.1} parent=11 // pred_check_branch
          %127 = sbr.rel (%p125) target = $region16
        $region15: #{tpu_custom_call.1} parent=11 // pred_region
          _
        $region16: #{tpu_custom_call.1} parent=11 // pred_fallthru
          _
      $region12: #{tpu_custom_call.1} parent=5 // pred_fallthru
        _
      %p128 = scmp.lt.s32.totalorder %s16, 4
      // Predicated region
      $region17: #{tpu_custom_call.1} parent=5 // pred_check
        %p129 = pneg %p128
      $region18: #{tpu_custom_call.1} parent=5 // pred_check_branch
        %131 = sbr.rel (%p129) target = $region20
      $region19: #{tpu_custom_call.1} parent=5 // pred_region
        // Predicated region
        $region21: #{tpu_custom_call.1} parent=19 // pred_check
          %p132 = pneg %p57
        $region22: #{tpu_custom_call.1} parent=19 // pred_check_branch
          %134 = sbr.rel (%p132) target = $region24
        $region23: #{tpu_custom_call.1} parent=19 // pred_region
          %s135 = sand.u32 %s47, 1
          %s136 = scalar_lea.sflag [#allocation7], %s135
          %s137 = sand.u32 %s47, 1
          %s138 = smul.addr %s137, 4
          %s139 = scalar_lea.vmem [#allocation6], %s138
          %s141 = ssub.s32 64, 64
          %142 = vsyncadd %s136, %s141
          %s143 = smul.addr %s16, 64
          %s144 = scalar_lea.hbm %s1, %s143
          %s146 = sshll.u32 %s139, 4
          %s147 = int_to_ptr.vmem [resolvable:$true] %s146
          %149 = dma.hbm_to_vmem [thread:$0]  %s144, 64, %s147, %s136
        $region24: #{tpu_custom_call.1} parent=19 // pred_fallthru
          _
        // Predicated region
        $region25: #{tpu_custom_call.1} parent=19 // pred_check
          %p150 = pneg %p83
        $region26: #{tpu_custom_call.1} parent=19 // pred_check_branch
          %152 = sbr.rel (%p150) target = $region28
        $region27: #{tpu_custom_call.1} parent=19 // pred_region
          %s153 = sand.u32 %s73, 1
          %s154 = scalar_lea.sflag [#allocation10], %s153
          %s155 = sand.u32 %s73, 1
          %s156 = smul.addr %s155, 4
          %s157 = scalar_lea.vmem [#allocation9], %s156
          %s159 = ssub.s32 64, 64
          %160 = vsyncadd %s154, %s159
          %s161 = smul.addr %s16, 64
          %s162 = scalar_lea.hbm %s2, %s161
          %s164 = sshll.u32 %s157, 4
          %s165 = int_to_ptr.vmem [resolvable:$true] %s164
          %167 = dma.hbm_to_vmem [thread:$0]  %s162, 64, %s165, %s154
        $region28: #{tpu_custom_call.1} parent=19 // pred_fallthru
          _
      $region20: #{tpu_custom_call.1} parent=5 // pred_fallthru
        _
      %p168 = scmp.le.s32.totalorder 1, %s16
      %p169 = scmp.lt.s32.totalorder %s16, 5
      %p170 = pnand %p168, %p169
      %p171 = pneg %p170
      // Predicated region
      $region29: #{tpu_custom_call.1} parent=5 // pred_check
        _
      $region30: #{tpu_custom_call.1} parent=5 // pred_check_branch
        %173 = sbr.rel (%p170) target = $region32
      $region31: #{tpu_custom_call.1} parent=5 // pred_region
        %s174 = ssub.s32 %s16, 1
        %s175 = sand.u32 %s50, 1
        %s176 = scalar_lea.sflag [#allocation7], %s175
        %s177 = sand.u32 %s50, 1
        %s178 = smul.addr %s177, 4
        %s179 = scalar_lea.vmem [#allocation6], %s178
        // Predicated region
        $region33: #{tpu_custom_call.1} parent=31 // pred_check
          %p180 = pneg %p63
        $region34: #{tpu_custom_call.1} parent=31 // pred_check_branch
          %182 = sbr.rel (%p180) target = $region36
        $region35: #{tpu_custom_call.1} parent=31 // pred_region
          %183 = dma.done %s176, 64
        $region36: #{tpu_custom_call.1} parent=31 // pred_fallthru
          _
        %s184 = sand.u32 %s76, 1
        %s185 = scalar_lea.sflag [#allocation10], %s184
        %s186 = sand.u32 %s76, 1
        %s187 = smul.addr %s186, 4
        %s188 = scalar_lea.vmem [#allocation9], %s187
        // Predicated region
        $region37: #{tpu_custom_call.1} parent=31 // pred_check
          %p189 = pneg %p89
        $region38: #{tpu_custom_call.1} parent=31 // pred_check_branch
          %191 = sbr.rel (%p189) target = $region40
        $region39: #{tpu_custom_call.1} parent=31 // pred_region
          %192 = dma.done %s185, 64
        $region40: #{tpu_custom_call.1} parent=31 // pred_fallthru
          _
        %p193 = pneg %p37
        %p194 = pneg %p34
        %s195 = sand.u32 %s50, 1
        %s196 = scalar_lea.sflag [#allocation7], %s195
        %s197 = sand.u32 %s50, 1
        %s198 = smul.addr %s197, 4
        %s199 = scalar_lea.vmem [#allocation6], %s198
        %p200 = pneg %p63
        %p201 = pneg %p60
        %s202 = sand.u32 %s76, 1
        %s203 = scalar_lea.sflag [#allocation10], %s202
        %s204 = sand.u32 %s76, 1
        %s205 = smul.addr %s204, 4
        %s206 = scalar_lea.vmem [#allocation9], %s205
        %p207 = pneg %p89
        %p208 = pneg %p86
        %p209 = pneg %p110
        %p210 = pneg %p107
        %p212 = scmp.eq.s32.totalorder %s21, 0
        // Predicated region
        $region41: #{tpu_custom_call.1} parent=31 // pred_check
          %p213 = pneg %p212
        $region42: #{tpu_custom_call.1} parent=31 // pred_check_branch
          %215 = sbr.rel (%p213) target = $region44
        $region43: #{tpu_custom_call.1} parent=31 // pred_region
          %v216 = vlaneseq
          %v217 = vshrl.u32 %v216, 7
          %v218 = vadd.s32 %v217, 8
          %v219 = vadd.s32 %v217, 16
          %v220 = vadd.s32 %v217, 24
          %v221 = vadd.s32 %v217, 32
          %v222 = vadd.s32 %v217, 40
          %v223 = vadd.s32 %v217, 48
          %v224 = vadd.s32 %v217, 56
          %v225 = vadd.s32 %v217, 64
          %v226 = vadd.s32 %v217, 72
          %v227 = vadd.s32 %v217, 80
          %v228 = vadd.s32 %v217, 88
          %v229 = vadd.s32 %v217, 96
          %v230 = vadd.s32 %v217, 104
          %v231 = vadd.s32 %v217, 112
          %v232 = vadd.s32 %v217, 120
          %v233 = vlaneseq
          %v234 = vand.u32 %v233, 127
          %vm235 = vcmp.le.s32.totalorder %v217, %v234
          %vm236 = vcmp.le.s32.totalorder %v218, %v234
          %vm237 = vcmp.le.s32.totalorder %v219, %v234
          %vm238 = vcmp.le.s32.totalorder %v220, %v234
          %vm239 = vcmp.le.s32.totalorder %v221, %v234
          %vm240 = vcmp.le.s32.totalorder %v222, %v234
          %vm241 = vcmp.le.s32.totalorder %v223, %v234
          %vm242 = vcmp.le.s32.totalorder %v224, %v234
          %vm243 = vcmp.le.s32.totalorder %v225, %v234
          %vm244 = vcmp.le.s32.totalorder %v226, %v234
          %vm245 = vcmp.le.s32.totalorder %v227, %v234
          %vm246 = vcmp.le.s32.totalorder %v228, %v234
          %vm247 = vcmp.le.s32.totalorder %v229, %v234
          %vm248 = vcmp.le.s32.totalorder %v230, %v234
          %vm249 = vcmp.le.s32.totalorder %v231, %v234
          %vm250 = vcmp.le.s32.totalorder %v232, %v234
          %v251 = vsel %vm235, 1.0, 0.0
          %v252 = vsel %vm236, 1.0, 0.0
          %v253 = vsel %vm237, 1.0, 0.0
          %v254 = vsel %vm238, 1.0, 0.0
          %v255 = vsel %vm239, 1.0, 0.0
          %v256 = vsel %vm240, 1.0, 0.0
          %v257 = vsel %vm241, 1.0, 0.0
          %v258 = vsel %vm242, 1.0, 0.0
          %v259 = vsel %vm243, 1.0, 0.0
          %v260 = vsel %vm244, 1.0, 0.0
          %v261 = vsel %vm245, 1.0, 0.0
          %v262 = vsel %vm246, 1.0, 0.0
          %v263 = vsel %vm247, 1.0, 0.0
          %v264 = vsel %vm248, 1.0, 0.0
          %v265 = vsel %vm249, 1.0, 0.0
          %v266 = vsel %vm250, 1.0, 0.0
          %v267 = vpack.c.bf16 %v252, %v251
          %v268 = vpack.c.bf16 %v254, %v253
          %v269 = vpack.c.bf16 %v256, %v255
          %v270 = vpack.c.bf16 %v258, %v257
          %v271 = vpack.c.bf16 %v260, %v259
          %v272 = vpack.c.bf16 %v262, %v261
          %v273 = vpack.c.bf16 %v264, %v263
          %v274 = vpack.c.bf16 %v266, %v265
          %275 = vst [vmem:[#allocation2] sm:$0xff] %v267
          %276 = vst [vmem:[#allocation2 + $0x8] sm:$0xff] %v268
          %277 = vst [vmem:[#allocation2 + $0x10] sm:$0xff] %v269
          %278 = vst [vmem:[#allocation2 + $0x18] sm:$0xff] %v270
          %279 = vst [vmem:[#allocation2 + $0x20] sm:$0xff] %v271
          %280 = vst [vmem:[#allocation2 + $0x28] sm:$0xff] %v272
          %281 = vst [vmem:[#allocation2 + $0x30] sm:$0xff] %v273
          %282 = vst [vmem:[#allocation2 + $0x38] sm:$0xff] %v274
          %vm283 = vcmask 3072
          %284 = vst.msk [vmem:[#allocation3] sm:$0xf] %vm283, 0.0
          %285 = vst.msk [vmem:[#allocation4] sm:$0xf] %vm283, 0.0
          %286 = vst.msk [vmem:[#allocation5] sm:$0xf] %vm283, 0.0
        $region44: #{tpu_custom_call.1} parent=31 // pred_fallthru
          _
        %v287 = vld [vmem:[%s179] sm:$0xf]
        %v288 = vld [vmem:[%s188] sm:$0xf]
        %v289 = vld [vmem:[%s0] sm:$0xf]
        %v290 = vpack.c.bf16 %v288, %v288
        %v291 = vld [vmem:[#allocation2] sm:$0xff]
        %v292 = vld [vmem:[#allocation2 + $0x8] sm:$0xff]
        %v293 = vld [vmem:[#allocation2 + $0x10] sm:$0xff]
        %v294 = vld [vmem:[#allocation2 + $0x18] sm:$0xff]
        %v295 = vld [vmem:[#allocation2 + $0x20] sm:$0xff]
        %v296 = vld [vmem:[#allocation2 + $0x28] sm:$0xff]
        %v297 = vld [vmem:[#allocation2 + $0x30] sm:$0xff]
        %v298 = vld [vmem:[#allocation2 + $0x38] sm:$0xff]
        %v299 = vld [vmem:[#allocation3] sm:$0xf]
        %301 = vset.pattern.permute.xlu0 0
        %302 = vperm.xlu0 %301, %v299
        %v303 = vpop.permute.xlu0 %302
        %305 = vmatprep.subr.bf16.mxu0 0
        %306 = vmatpush1.bf16.msra.mxu0 %v291
        %307 = vmatprep.subr.bf16.mxu0 0
        %308 = vmatpush1.bf16.msra.mxu0 %v292
        %309 = vmatprep.subr.bf16.mxu0 0
        %310 = vmatpush1.bf16.msra.mxu0 %v293
        %311 = vmatprep.subr.bf16.mxu0 0
        %312 = vmatpush1.bf16.msra.mxu0 %v294
        %313 = vmatprep.subr.bf16.mxu0 0
        %314 = vmatpush1.bf16.msra.mxu0 %v295
        %315 = vmatprep.subr.bf16.mxu0 0
        %316 = vmatpush1.bf16.msra.mxu0 %v296
        %317 = vmatprep.subr.bf16.mxu0 0
        %318 = vmatpush1.bf16.msra.mxu0 %v297
        %319 = vmatprep.subr.bf16.mxu0 0
        %320 = vmatpush1.bf16.msra.mxu0 %v298
        %321 = vmatprep.subr.bf16.mxu0 0
        %322 = vmatpush1.bf16.msra.mxu0 0
        %323 = vmatprep.subr.bf16.mxu0 0
        %324 = vmatpush1.bf16.msra.mxu0 0
        %325 = vmatprep.subr.bf16.mxu0 0
        %326 = vmatpush1.bf16.msra.mxu0 0
        %327 = vmatprep.subr.bf16.mxu0 0
        %328 = vmatpush1.bf16.msra.mxu0 0
        %329 = vmatprep.subr.bf16.mxu0 0
        %330 = vmatpush1.bf16.msra.mxu0 0
        %331 = vmatprep.subr.bf16.mxu0 0
        %332 = vmatpush1.bf16.msra.mxu0 0
        %333 = vmatprep.subr.bf16.mxu0 0
        %334 = vmatpush1.bf16.msra.mxu0 0
        %335 = vmatprep.subr.bf16.mxu0 0
        %336 = vmatpush1.bf16.msra.mxu0 0
        %337 = vmatprep.mubr.bf16.mxu0 0
        %338 = vmatmul.mubr.bf16.gmra.mrb[0].mxu0 %v290
        %v339 = vpop.f32.mrb[0].mxu0
        %v340 = vadd.f32 %v303, %v339
        %v341 = vpop.f32.mrb[0].mxu0
        %v342 = vpop.f32.mrb[0].mxu0
        %v343 = vpop.f32.mrb[0].mxu0
        %344 = vdwg.mxu0
        %v345 = vlaneseq
        %v346 = vand.u32 %v345, 127
        %s347 = smul.u32 %s21, 128
        %s348 = scvt.s32.f32 %s347
        %v349 = vcvt.s32.f32 %v346
        %v350 = vstv %s348
        %v351 = vadd.f32 %v350, %v349
        %v352 = vadd.f32 %v351, 1.0
        %354 = vset.pattern.permute.xlu0 0
        %355 = vperm.xlu0 %354, %v289
        %v356 = vpop.permute.xlu0 %355
        %v358 = vsub.f32 %v356, %v340
        %v359 = vsub.f32 %v352, %v340
        %v360 = vadd.f32 %v356, %v359
        %v361 = vrcp.pop %v360
        %v362 = vmul.f32 %v358, %v361
        %v363 = vsub.f32 1.0, %v362
        %364 = vrot.lane.b32.xlu0 %v363, 1
        %v365 = vpop.permute.xlu0 %364
        %vm366 = vcmp.eq.s32.totalorder %v346, 0
        %v367 = vld [vmem:[#allocation4] sm:$0xf]
        %369 = vset.pattern.permute.xlu0 0
        %370 = vperm.xlu0 %369, %v367
        %v371 = vpop.permute.xlu0 %370
        %v373 = vsel %vm366, %v371, %v365
        %v374 = vsub.f32 %v363, %v373
        %v375 = vld [vmem:[#allocation5] sm:$0xf]
        %v376 = vmul.f32 %v287, %v374
        %vm377 = vcmask 1043456
        %v378 = vsel %vm377, %v376, 0.0
        %379 = vadd.xlane.f32.xlu0 %v378
        %v380 = vpop.xlane.xlu0 %379
        %v381 = vadd.f32 %v375, %v380
        %vm382 = vcmask 3072
        %383 = vst.msk [vmem:[#allocation5] sm:$0xf] %vm382, %v381
        %385 = vrot.lane.b32.xlu0 %v340, 1
        %v386 = vpop.permute.xlu0 %385
        %388 = vst.msk [vmem:[#allocation3] sm:$0xf] %vm382, %v386
        %390 = vrot.lane.b32.xlu0 %v363, 1
        %v391 = vpop.permute.xlu0 %390
        %393 = vst.msk [vmem:[#allocation4] sm:$0xf] %vm382, %v391
        %p394 = scmp.eq.s32.totalorder %s21, 3
        // Predicated region
        $region45: #{tpu_custom_call.1} parent=31 // pred_check
          %p395 = pneg %p394
        $region46: #{tpu_custom_call.1} parent=31 // pred_check_branch
          %397 = sbr.rel (%p395) target = $region48
        $region47: #{tpu_custom_call.1} parent=31 // pred_region
          %vm398 = vcmp.gt.f32.partialorder %v289, 0.0
          %v399 = vsel %vm398, 1, 0
          %v400 = vcvt.s32.f32 %v399
          %v401 = vld [vmem:[#allocation5] sm:$0xf]
          %v402 = vmul.f32 %v401, %v400
          %v403 = vsel %vm382, %v402, 0.0
          %v404 = vrot.slane %v403, 4
          %v405 = vadd.f32 %v403, %v404
          %v406 = vrot.slane %v405, 2
          %v407 = vadd.f32 %v405, %v406
          %v408 = vrot.slane %v407, 1
          %v409 = vadd.f32 %v407, %v408
          %v410 = vsel %vm382, %v400, 0.0
          %v411 = vrot.slane %v410, 4
          %v412 = vadd.f32 %v410, %v411
          %v413 = vrot.slane %v412, 2
          %v414 = vadd.f32 %v412, %v413
          %v415 = vrot.slane %v414, 1
          %v416 = vadd.f32 %v414, %v415
          %vm417 = vcmp.gt.f32.partialorder %v416, 0.0
          %v418 = vrcp.pop %v416
          %v419 = vmul.f32 %v409, %v418
          %v420 = vsel %vm417, %v419, 0.0
          %vm421 = vcmask 0
          %422 = vst.msk [vmem:[#allocation11] sm:$0x1] %vm421, %v420
        $region48: #{tpu_custom_call.1} parent=31 // pred_fallthru
          _
        // Predicated region
        $region49: #{tpu_custom_call.1} parent=31 // pred_check
          %p423 = pneg %p107
        $region50: #{tpu_custom_call.1} parent=31 // pred_check_branch
          %425 = sbr.rel (%p423) target = $region52
        $region51: #{tpu_custom_call.1} parent=31 // pred_region
          %s427 = ssub.s32 16, 16
          %428 = vsyncadd [#allocation8], %s427
          %s430 = sshll.u32 [#allocation11], 4
          %s431 = int_to_ptr.vmem [resolvable:$true] %s430
          %433 = dma.vmem_to_hbm [thread:$0]  %s431, 16, %s3, [#allocation8]
        $region52: #{tpu_custom_call.1} parent=31 // pred_fallthru
          _
        // Predicated region
        $region53: #{tpu_custom_call.1} parent=31 // pred_check
          %p434 = pneg %p107
        $region54: #{tpu_custom_call.1} parent=31 // pred_check_branch
          %436 = sbr.rel (%p434) target = $region56
        $region55: #{tpu_custom_call.1} parent=31 // pred_region
          %437 = dma.done [#allocation8], 16
        $region56: #{tpu_custom_call.1} parent=31 // pred_fallthru
          _
      $region32: #{tpu_custom_call.1} parent=5 // pred_fallthru
        _
      %p438 = scmp.le.s32.totalorder 2, %s16
      // Predicated region
      $region57: #{tpu_custom_call.1} parent=5 // pred_check
        %p439 = pneg %p438
      $region58: #{tpu_custom_call.1} parent=5 // pred_check_branch
        %441 = sbr.rel (%p439) target = $region60
      $region59: #{tpu_custom_call.1} parent=5 // pred_region
        %s442 = ssub.s32 %s16, 2
      $region60: #{tpu_custom_call.1} parent=5 // pred_fallthru
        _
    $region6: #{tpu_custom_call.1} parent=1 // loop_footer
      %s20 = sadd.s32 1, %s16
    $region7: #{tpu_custom_call.1} parent=1 // loop_footer_branch
      %15 = sbr.rel target = $region3
    $region8: #{tpu_custom_call.1} parent=1 // loop_exit
      _
    %443 = vsyncpa [#allocation7], 1
    %s444 = scalar_lea.sflag [#allocation7], 1
    %445 = vsyncpa %s444, 1
    %446 = vsyncpa [#allocation10], 1
    %s447 = scalar_lea.sflag [#allocation10], 1
    %448 = vsyncpa %s447, 1
    %449 = vsyncpa [#allocation8], 1
    %s450 = scalar_lea.sflag [#allocation8], 1
    %451 = vsyncpa %s450, 1

</llo_original>
